<compile_context>
chip_gen: v6e
topology: v6e:2x2x1
jax: 0.10.0
libtpu: 0.0.40
codegen_flags: <defaults>
</compile_context>

<pallas_src>
import jax
import jax.numpy as jnp
from jax.experimental import pallas as pl
from jax.experimental.pallas import tpu as pltpu

_MiB = 1024 * 1024


def _round_up(x, m):
    return ((x + m - 1) // m) * m


# --------------------------------------------------------------------------- #
# Kernels
# --------------------------------------------------------------------------- #
def _mlp_kernel_acc(x_ref, w1_ref, b1_ref, w2_ref, b2_ref, o_ref, acc_ref):
    """Hidden dim streamed over grid axis 2; f32 accumulator resident in VMEM."""
    k = pl.program_id(2)

    @pl.when(k == 0)
    def _init():
        # Fold the fc2 bias into the accumulator init -> epilogue is cast+store.
        acc_ref[...] = jnp.broadcast_to(b2_ref[...], acc_ref.shape)

    # fc1 chunk + bias + ReLU, in f32.
    h = jnp.dot(x_ref[...], w1_ref[...], preferred_element_type=jnp.float32)
    h = jnp.maximum(h + b1_ref[...], 0.0)

    # fc2 chunk, accumulated in f32.
    acc_ref[...] += jnp.dot(h.astype(w2_ref.dtype), w2_ref[...],
                            preferred_element_type=jnp.float32)

    @pl.when(k == pl.num_programs(2) - 1)
    def _finalize():
        o_ref[...] = acc_ref[...].astype(o_ref.dtype)


def _mlp_kernel_single(x_ref, w1_ref, b1_ref, w2_ref, b2_ref, o_ref):
    """Single hidden chunk: no accumulator scratch, compute and store directly."""
    h = jnp.dot(x_ref[...], w1_ref[...], preferred_element_type=jnp.float32)
    h = jnp.maximum(h + b1_ref[...], 0.0)
    y = jnp.dot(h.astype(w2_ref.dtype), w2_ref[...],
                preferred_element_type=jnp.float32) + b2_ref[...]
    o_ref[...] = y.astype(o_ref.dtype)


# --------------------------------------------------------------------------- #
# Device-aware configuration
# --------------------------------------------------------------------------- #
def _device_info():
    kind = ""
    try:
        kind = jax.devices()[0].device_kind.lower()
    except Exception:
        pass
    vmem = None
    try:
        vmem = int(pltpu.get_tpu_info().vmem_capacity_bytes)
    except Exception:
        vmem = None
    is_v7 = ("v7" in kind) or ("tpu7" in kind)
    if not vmem or vmem <= 0:
        if is_v7:
            vmem = 64 * _MiB
        elif any(g in kind for g in ("v4", "v5", "v6")):
            vmem = 128 * _MiB
        else:
            vmem = 64 * _MiB  # conservative default
    # v6e/v7x MXUs are 2x256x256 -> align K/N to 256; v5e (4x128x128) keeps 128.
    align = 256 if ("v6" in kind or is_v7) else 128
    two_cores = is_v7
    return kind, vmem, align, two_cores


def _working_set(bb, bh, bn, d_in_p, in_bytes, out_bytes):
    return (2 * bb * d_in_p * in_bytes      # x tiles (double-buffered)
            + 2 * d_in_p * bh * in_bytes    # w1 tiles
            + 2 * 8 * bh * 4                # b1 tiles (f32, sublane-padded)
            + 2 * bh * bn * in_bytes        # w2 tiles
            + 2 * 8 * bn * 4                # b2 tiles
            + 2 * bb * bn * out_bytes       # out tiles
            + bb * bn * 4)                  # f32 accumulator scratch


def prepare_mlp_params(w1_t, b1, w2_t, b2, *, compute_dtype=jnp.bfloat16,
                       block_b=None, block_h=None, block_n=None,
                       vmem_budget_bytes=None):
    """Pad + cast the MLP weights ONCE into the kernel's tiled layout.

    w1_t: (D_in, D_hid); b1: (D_hid,); w2_t: (D_hid, D_out); b2: (D_out,)
    (weights stored pre-transposed relative to torch's (out, in) layout).
    """
    D_in, D_hid = w1_t.shape
    D_out = w2_t.shape[1]

    kind, vmem_cap, align, two_cores = _device_info()
    if vmem_budget_bytes is None:
        # ~75% of physical VMEM: ~96 MiB on v5e/v6e (128 MiB), ~48 MiB on v7x.
        vmem_budget_bytes = (vmem_cap * 3) // 4

    in_bytes = jnp.dtype(compute_dtype).itemsize
    out_bytes = 4  # budget conservatively for an f32 output

    D_in_p = _round_up(D_in, align)

    # Batch tile upper bound: large enough to stay MXU-bound on the streamed
    # weights (>=768 on 128 MiB parts per the roofline), multiple of 128.
    if block_b is None:
        block_b = 1024 if vmem_budget_bytes >= 80 * _MiB else 512
    block_b = max(128, _round_up(block_b, 128))

    if block_h is None:
        block_h = min(512, _round_up(D_hid, align))
    block_h = max(align, _round_up(block_h, align))

    if block_n is None:
        block_n = _round_up(D_out, align)
    block_n = max(align, _round_up(block_n, align))

    # Shrink to fit the budget: hidden chunk first, then output chunk, and only
    # then the batch tile (keeps weight-stream arithmetic intensity high).
    while _working_set(block_b, block_h, block_n, D_in_p,
                       in_bytes, out_bytes) > vmem_budget_bytes:
        if block_h > align:
            block_h = max(align, _round_up(block_h // 2, align))
        elif block_n > align:
            block_n = max(align, _round_up(block_n // 2, align))
        elif block_b > 128:
            block_b //= 2
        else:
            break  # smallest config; vmem_limit below will stretch if needed

    D_hid_p = _round_up(D_hid, block_h)
    D_out_p = _round_up(D_out, block_n)

    def pad2(a, rows, cols, dtype):
        a = jnp.asarray(a, dtype)
        return jnp.pad(a, ((0, rows - a.shape[0]), (0, cols - a.shape[1])))

    # One-time pad/cast (zero padding is inert through matmul / ReLU).
    w1p = pad2(w1_t, D_in_p, D_hid_p, compute_dtype)
    w2p = pad2(w2_t, D_hid_p, D_out_p, compute_dtype)
    b1p = pad2(jnp.reshape(b1, (1, -1)), 1, D_hid_p, jnp.float32)
    b2p = pad2(jnp.reshape(b2, (1, -1)), 1, D_out_p, jnp.float32)

    return dict(
        w1p=w1p, b1p=b1p, w2p=w2p, b2p=b2p,
        D_in=D_in, D_hid=D_hid, D_out=D_out,
        D_in_p=D_in_p, D_hid_p=D_hid_p, D_out_p=D_out_p,
        block_b=block_b, block_h=block_h, block_n=block_n,
        compute_dtype=compute_dtype, align=align,
        vmem_cap=vmem_cap, two_cores=two_cores,
    )


# --------------------------------------------------------------------------- #
# Forward
# --------------------------------------------------------------------------- #
def _mlp_xla(x, p):
    """Plain-XLA path for tiny shapes (padded weight columns are zero -> inert)."""
    cd = p["compute_dtype"]
    xp = jnp.pad(x.astype(cd), ((0, 0), (0, p["D_in_p"] - x.shape[1])))
    h = jnp.dot(xp, p["w1p"], preferred_element_type=jnp.float32) + p["b1p"]
    h = jnp.maximum(h, 0.0).astype(cd)
    y = jnp.dot(h, p["w2p"], preferred_element_type=jnp.float32) + p["b2p"]
    return y[:, :p["D_out"]].astype(x.dtype)


def mlp_forward(x, params, *, use_pallas=None):
    """y = relu(x @ W1.T + b1) @ W2.T + b2 (same math as the torch MLP)."""
    p = params
    B, D_in = x.shape
    assert D_in == p["D_in"], "input feature dim mismatch"
    out_dtype = x.dtype
    cd = p["compute_dtype"]

    if use_pallas is None:
        # Tiny problems: padding to MXU tiles + per-grid-step overhead loses to
        # fused XLA; dispatch there instead.
        use_pallas = max(B, p["D_in"], p["D_hid"], p["D_out"]) >= 128
    if not use_pallas:
        return _mlp_xla(x, p)

    D_in_p, D_hid_p, D_out_p = p["D_in_p"], p["D_hid_p"], p["D_out_p"]
    block_h = p["block_h"]

    # Effective batch tile: never larger than the (128-rounded) batch itself.
    block_b = min(p["block_b"], _round_up(B, 128))
    B_p = _round_up(B, block_b)
    n_batch_tiles = B_p // block_b

    # Output tile; on dual-TensorCore parts (v7x) with a single batch tile,
    # split D_out in two so both cores get a "parallel" slice of work.
    block_n = p["block_n"]
    if (p["two_cores"] and n_batch_tiles == 1 and block_n == D_out_p
            and block_n >= 2 * p["align"] and (block_n // p["align"]) % 2 == 0):
        block_n //= 2

    grid = (n_batch_tiles, D_out_p // block_n, D_hid_p // block_h)

    xp = jnp.pad(x.astype(cd), ((0, B_p - B), (0, D_in_p - D_in)))

    in_bytes = jnp.dtype(cd).itemsize
    out_bytes = jnp.dtype(out_dtype).itemsize

    # Weights are re-streamed from HBM: w1/b1 once per (batch, out) tile pair,
    # w2/b2 once per batch tile.
    bytes_accessed = (
        xp.size * in_bytes
        + (p["w1p"].size * in_bytes + p["b1p"].size * 4) * grid[0] * grid[1]
        + (p["w2p"].size * in_bytes + p["b2p"].size * 4) * grid[0]
        + B_p * D_out_p * out_bytes)
    flops = 2 * B_p * D_in_p * D_hid_p + 2 * B_p * D_hid_p * D_out_p
    cost = pl.CostEstimate(flops=int(flops), transcendentals=0,
                           bytes_accessed=int(bytes_accessed))

    needed = _working_set(block_b, block_h, block_n, D_in_p, in_bytes, out_bytes)
    # Cap to physical VMEM minus headroom (v7x has only 64 MiB).
    vmem_limit = int(min(p["vmem_cap"] - 8 * _MiB, 127 * _MiB,
                         max(needed + needed // 2, 32 * _MiB)))
    vmem_limit = int(max(vmem_limit, min(needed, p["vmem_cap"] - 4 * _MiB)))

    single_chunk = grid[2] == 1
    kernel = _mlp_kernel_single if single_chunk else _mlp_kernel_acc
    scratch = ([] if single_chunk
               else [pltpu.VMEM((block_b, block_n), jnp.float32)])
    # NOTE: pipeline_mode=pl.Buffered(3) on the weight specs could help
    # borderline mem-bound v5e shapes; left at the default depth-2 for safety.

    out_p = pl.pallas_call(
        kernel,
        out_shape=jax.ShapeDtypeStruct((B_p, D_out_p), out_dtype),
        grid_spec=pltpu.PrefetchScalarGridSpec(
            num_scalar_prefetch=0,
            grid=grid,
            in_specs=[
                pl.BlockSpec((block_b, D_in_p), lambda i, j, k: (i, 0)),
                pl.BlockSpec((D_in_p, block_h), lambda i, j, k: (0, k)),
                pl.BlockSpec((1, block_h), lambda i, j, k: (0, k)),
                pl.BlockSpec((block_h, block_n), lambda i, j, k: (k, j)),
                pl.BlockSpec((1, block_n), lambda i, j, k: (0, j)),
            ],
            out_specs=pl.BlockSpec((block_b, block_n), lambda i, j, k: (i, j)),
            scratch_shapes=scratch,
        ),
        compiler_params=pltpu.CompilerParams(
            dimension_semantics=("parallel", "parallel", "arbitrary"),
            vmem_limit_bytes=vmem_limit,
        ),
        cost_estimate=cost,
    )(xp, p["w1p"], p["b1p"], p["w2p"], p["b2p"])

    return out_p[:B, :p["D_out"]]


# --------------------------------------------------------------------------- #
# Init + self-test
# --------------------------------------------------------------------------- #
def init_mlp_params(key, input_size, hidden_size, output_size):
    """Deterministic init mirroring nn.Linear default uniform(-1/sqrt(fan_in), +)."""
    k1, k2, k3, k4 = jax.random.split(key, 4)
    bound1 = 1.0 / (input_size ** 0.5)
    bound2 = 1.0 / (hidden_size ** 0.5)
    # PyTorch stores weight as (out, in); we keep the transposed (in, out) layout.
    w1_t = jax.random.uniform(k1, (input_size, hidden_size), jnp.float32,
                              -bound1, bound1)
    b1 = jax.random.uniform(k2, (hidden_size,), jnp.float32, -bound1, bound1)
    w2_t = jax.random.uniform(k3, (hidden_size, output_size), jnp.float32,
                              -bound2, bound2)
    b2 = jax.random.uniform(k4, (output_size,), jnp.float32, -bound2, bound2)
    return w1_t, b1, w2_t, b2


if __name__ == "__main__":
    def run_case(batch, d_in, d_hid, d_out, subkey):
        kx, kp = jax.random.split(subkey)
        x = jax.random.normal(kx, (batch, d_in), jnp.float32)
        w1_t, b1, w2_t, b2 = init_mlp_params(kp, d_in, d_hid, d_out)

        params = prepare_mlp_params(w1_t, b1, w2_t, b2)   # one-time pad/cast
        out = mlp_forward(x, params, use_pallas=True)     # force the Pallas kernel
        out = jax.block_until_ready(out)
        assert out.shape == (batch, d_out)

        # Reference with the same bf16 input/weight quantization and f32
        # accumulation used by the kernel (same math as the PyTorch module).
        f32 = jnp.float32
        xb = x.astype(jnp.bfloat16).astype(f32)
        w1b = w1_t.astype(jnp.bfloat16).astype(f32)
        w2b = w2_t.astype(jnp.bfloat16).astype(f32)
        h_ref = jnp.maximum(xb @ w1b + b1, 0.0).astype(jnp.bfloat16).astype(f32)
        ref = h_ref @ w2b + b2
        err = float(jnp.max(jnp.abs(out - ref)))
        assert jnp.allclose(out, ref, atol=2e-2, rtol=2e-2), err

        # Auto-dispatch path (XLA fallback for tiny shapes) must agree too.
        out_auto = jax.block_until_ready(mlp_forward(x, params))
        err2 = float(jnp.max(jnp.abs(out_auto - ref)))
        assert jnp.allclose(out_auto, ref, atol=2e-2, rtol=2e-2), err2

    key = jax.random.PRNGKey(0)
    k1, k2 = jax.random.split(key)
    # Small shape matching the module's typical use (single hidden chunk path).
    run_case(batch=8, d_in=32, d_hid=64, d_out=16, subkey=k1)
    # Shape that exercises hidden-dim streaming + the f32 accumulator path.
    run_case(batch=16, d_in=128, d_hid=1024, d_out=64, subkey=k2)

    print("KERNEL_OK")
</pallas_src>

<mosaic_0001>
module attributes {stable_mosaic.version = 11 : i64} {
  func.func @_mlp_kernel_single(%arg0: i32, %arg1: i32, %arg2: i32, %arg3: memref<128x128xbf16, #tpu.memory_space<vmem>>, %arg4: memref<128x128xbf16, #tpu.memory_space<vmem>>, %arg5: memref<1x128xf32, #tpu.memory_space<vmem>>, %arg6: memref<128x128xbf16, #tpu.memory_space<vmem>>, %arg7: memref<1x128xf32, #tpu.memory_space<vmem>>, %arg8: memref<128x128xf32, #tpu.memory_space<vmem>>) attributes {dimension_semantics = [#tpu.dimension_semantics<parallel>, #tpu.dimension_semantics<parallel>, #tpu.dimension_semantics<arbitrary>], iteration_bounds = array<i64: 1, 1, 1>, scalar_prefetch = 0 : i64, scratch_operands = 0 : i64, tpu.core_type = #tpu.core_type<tc>, window_params = [{transform_indices = @transform_0, window_bounds = array<i64: 128, 128>}, {transform_indices = @transform_1, window_bounds = array<i64: 128, 128>}, {transform_indices = @transform_2, window_bounds = array<i64: 1, 128>}, {transform_indices = @transform_3, window_bounds = array<i64: 128, 128>}, {transform_indices = @transform_4, window_bounds = array<i64: 1, 128>}, {transform_indices = @transform_5, window_bounds = array<i64: 128, 128>}]} {
    %c0 = arith.constant 0 : index
    %c0_0 = arith.constant 0 : index
    %0 = vector.load %arg3[%c0, %c0_0] : memref<128x128xbf16, #tpu.memory_space<vmem>>, vector<128x128xbf16>
    %c0_1 = arith.constant 0 : index
    %c0_2 = arith.constant 0 : index
    %1 = vector.load %arg4[%c0_1, %c0_2] : memref<128x128xbf16, #tpu.memory_space<vmem>>, vector<128x128xbf16>
    %cst = arith.constant dense<0.000000e+00> : vector<128x128xf32>
    %2 = tpu.matmul %0, %1, %cst {dimension_numbers = #tpu.dot_dimension_numbers<[1], [0], [0], [1], [0, 0, 1, 1], [], []>} : vector<128x128xbf16>, vector<128x128xbf16>, vector<128x128xf32> -> vector<128x128xf32>
    %c0_3 = arith.constant 0 : index
    %c0_4 = arith.constant 0 : index
    %3 = vector.load %arg5[%c0_3, %c0_4] : memref<1x128xf32, #tpu.memory_space<vmem>>, vector<1x128xf32>
    %4 = vector.broadcast %3 : vector<1x128xf32> to vector<128x128xf32>
    %5 = arith.addf %2, %4 : vector<128x128xf32>
    %cst_5 = arith.constant 0.000000e+00 : f32
    %6 = vector.broadcast %cst_5 : f32 to vector<128x128xf32>
    %7 = arith.maximumf %5, %6 : vector<128x128xf32>
    %8 = arith.truncf %7 : vector<128x128xf32> to vector<128x128xbf16>
    %c0_6 = arith.constant 0 : index
    %c0_7 = arith.constant 0 : index
    %9 = vector.load %arg6[%c0_6, %c0_7] : memref<128x128xbf16, #tpu.memory_space<vmem>>, vector<128x128xbf16>
    %cst_8 = arith.constant dense<0.000000e+00> : vector<128x128xf32>
    %10 = tpu.matmul %8, %9, %cst_8 {dimension_numbers = #tpu.dot_dimension_numbers<[1], [0], [0], [1], [0, 0, 1, 1], [], []>} : vector<128x128xbf16>, vector<128x128xbf16>, vector<128x128xf32> -> vector<128x128xf32>
    %c0_9 = arith.constant 0 : index
    %c0_10 = arith.constant 0 : index
    %11 = vector.load %arg7[%c0_9, %c0_10] : memref<1x128xf32, #tpu.memory_space<vmem>>, vector<1x128xf32>
    %12 = vector.broadcast %11 : vector<1x128xf32> to vector<128x128xf32>
    %13 = arith.addf %10, %12 : vector<128x128xf32>
    %c0_11 = arith.constant 0 : index
    %c0_12 = arith.constant 0 : index
    %14 = vector.load %arg8[%c0_11, %c0_12] : memref<128x128xf32, #tpu.memory_space<vmem>>, vector<128x128xf32>
    tpu.vector_store %arg8[%c0_11, %c0_12], %13 {strides = array<i32>} : memref<128x128xf32, #tpu.memory_space<vmem>>, vector<128x128xf32>,
    return
  }
  func.func @transform_0(%arg0: i32, %arg1: i32, %arg2: i32) -> (i32, i32) {
    %c0_i32 = arith.constant 0 : i32
    %c0_i32_0 = arith.constant 0 : i32
    return %arg0, %c0_i32 : i32, i32
  }
  func.func @transform_1(%arg0: i32, %arg1: i32, %arg2: i32) -> (i32, i32) {
    %c0_i32 = arith.constant 0 : i32
    %c0_i32_0 = arith.constant 0 : i32
    return %c0_i32, %arg2 : i32, i32
  }
  func.func @transform_2(%arg0: i32, %arg1: i32, %arg2: i32) -> (i32, i32) {
    %c0_i32 = arith.constant 0 : i32
    %c0_i32_0 = arith.constant 0 : i32
    return %c0_i32, %arg2 : i32, i32
  }
  func.func @transform_3(%arg0: i32, %arg1: i32, %arg2: i32) -> (i32, i32) {
    %c0_i32 = arith.constant 0 : i32
    return %arg2, %arg1 : i32, i32
  }
  func.func @transform_4(%arg0: i32, %arg1: i32, %arg2: i32) -> (i32, i32) {
    %c0_i32 = arith.constant 0 : i32
    %c0_i32_0 = arith.constant 0 : i32
    return %c0_i32, %arg1 : i32, i32
  }
  func.func @transform_5(%arg0: i32, %arg1: i32, %arg2: i32) -> (i32, i32) {
    %c0_i32 = arith.constant 0 : i32
    return %arg0, %arg1 : i32, i32
  }
}

</mosaic_0001>

<llo_original>
// kernel: tpu_custom_call.1
$region0: #{tpu_custom_call.1}
  #allocation0 [shape = 'u32[]', space=smem, size = 0x4, offset = 0x4, fixed_abs, tag = 'smem constant byte address 0x4 - core index']
  #allocation1 [shape = 'u32[144,128]{1,0:T(1,128)}', space=vmem, size = 0x12000, scoped, tag = 'internal scratch']
  %s0 = inlined_call_operand.hbm [shape: bf16[128,128], index: 0, kind: input, shape index: {}]
  %s1 = inlined_call_operand.hbm [shape: bf16[128,128], index: 1, kind: input, shape index: {}]
  %s2 = inlined_call_operand.vmem [shape: f32[1,128], index: 2, kind: input, shape index: {}]
  %s3 = inlined_call_operand.hbm [shape: bf16[128,128], index: 3, kind: input, shape index: {}]
  %s4 = inlined_call_operand.vmem [shape: f32[1,128], index: 4, kind: input, shape index: {}]
  %s5 = inlined_call_operand.hbm [shape: f32[128,128], index: 5, kind: output, shape index: {}]
  %s6 = sld [smem:[#allocation0]]
  $region42: #{tpu_custom_call.1} parent=0
    _
  %s8 = ssub.s32 1, %s6
  %s9 = scalar_select 0, %s8, %s6
  $region1: #{tpu_custom_call.1} parent=0
    #allocation2 [shape = 'u8[32768]{0}', space=vmem, size = 0x8000, scoped, tag = 'input window, operand 0, single buffered']
    #allocation3 [shape = 's32[1]{0}', space=sflag, size = 0x4, scoped, tag = 'scoped memory for tpu_custom_call.1']
    #allocation4 [shape = 's32[1]{0}', space=sflag, size = 0x4, scoped, tag = 'scoped memory for tpu_custom_call.1']
    #allocation5 [shape = 'u8[32768]{0}', space=vmem, size = 0x8000, scoped, tag = 'input window, operand 1, single buffered']
    #allocation6 [shape = 's32[1]{0}', space=sflag, size = 0x4, scoped, tag = 'scoped memory for tpu_custom_call.1']
    #allocation7 [shape = 'u8[32768]{0}', space=vmem, size = 0x8000, scoped, tag = 'input window, operand 3, single buffered']
    #allocation8 [shape = 'u8[65536]{0}', space=vmem, size = 0x10000, scoped, tag = 'output window, operand 0, single buffered']
    %10 = vsyncpa [#allocation3], 0
    %11 = vsyncpa [#allocation6], 0
    %12 = vsyncpa [#allocation4], 0
    // Predicated region
    $region2: #{tpu_custom_call.1} parent=1 // pred_check
      _
    $region3: #{tpu_custom_call.1} parent=1 // pred_check_branch
      %14 = sbr.rel (0) target = $region5
    $region4: #{tpu_custom_call.1} parent=1 // pred_region
      %s16 = ssub.s32 1024, 1024
      %17 = vsyncadd [#allocation3], %s16
      %s18 = sshll.u32 [#allocation2], 4
      %s19 = int_to_ptr.vmem [resolvable:$true] %s18
      %24 = dma.hbm_to_vmem [thread:$0]  %s0, 1024, %s19, [#allocation3], 64, 64, 4
    $region5: #{tpu_custom_call.1} parent=1 // pred_fallthru
      _
    // Predicated region
    $region6: #{tpu_custom_call.1} parent=1 // pred_check
      _
    $region7: #{tpu_custom_call.1} parent=1 // pred_check_branch
      %26 = sbr.rel (0) target = $region9
    $region8: #{tpu_custom_call.1} parent=1 // pred_region
      %s28 = ssub.s32 1024, 1024
      %29 = vsyncadd [#allocation6], %s28
      %s30 = sshll.u32 [#allocation5], 4
      %s31 = int_to_ptr.vmem [resolvable:$true] %s30
      %36 = dma.hbm_to_vmem [thread:$0]  %s1, 1024, %s31, [#allocation6], 64, 64, 4
    $region9: #{tpu_custom_call.1} parent=1 // pred_fallthru
      _
    // Predicated region
    $region10: #{tpu_custom_call.1} parent=1 // pred_check
      _
    $region11: #{tpu_custom_call.1} parent=1 // pred_check_branch
      %38 = sbr.rel (0) target = $region13
    $region12: #{tpu_custom_call.1} parent=1 // pred_region
      _
    $region13: #{tpu_custom_call.1} parent=1 // pred_fallthru
      _
    // Predicated region
    $region14: #{tpu_custom_call.1} parent=1 // pred_check
      _
    $region15: #{tpu_custom_call.1} parent=1 // pred_check_branch
      %40 = sbr.rel (0) target = $region17
    $region16: #{tpu_custom_call.1} parent=1 // pred_region
      %s42 = ssub.s32 1024, 1024
      %43 = vsyncadd [#allocation6], %s42
      %s44 = sshll.u32 [#allocation7], 4
      %s45 = int_to_ptr.vmem [resolvable:$true] %s44
      %50 = dma.hbm_to_vmem [thread:$0]  %s3, 1024, %s45, [#allocation6], 64, 64, 4
    $region17: #{tpu_custom_call.1} parent=1 // pred_fallthru
      _
    // Predicated region
    $region18: #{tpu_custom_call.1} parent=1 // pred_check
      _
    $region19: #{tpu_custom_call.1} parent=1 // pred_check_branch
      %52 = sbr.rel (0) target = $region21
    $region20: #{tpu_custom_call.1} parent=1 // pred_region
      _
    $region21: #{tpu_custom_call.1} parent=1 // pred_fallthru
      _
    // Predicated region
    $region22: #{tpu_custom_call.1} parent=1 // pred_check
      _
    $region23: #{tpu_custom_call.1} parent=1 // pred_check_branch
      %54 = sbr.rel (0) target = $region25
    $region24: #{tpu_custom_call.1} parent=1 // pred_region
      %55 = dma.done [#allocation3], 1024
    $region25: #{tpu_custom_call.1} parent=1 // pred_fallthru
      _
    // Predicated region
    $region26: #{tpu_custom_call.1} parent=1 // pred_check
      _
    $region27: #{tpu_custom_call.1} parent=1 // pred_check_branch
      %57 = sbr.rel (0) target = $region29
    $region28: #{tpu_custom_call.1} parent=1 // pred_region
      %58 = dma.done [#allocation6], 1024
    $region29: #{tpu_custom_call.1} parent=1 // pred_fallthru
      _
    // Predicated region
    $region30: #{tpu_custom_call.1} parent=1 // pred_check
      _
    $region31: #{tpu_custom_call.1} parent=1 // pred_check_branch
      %60 = sbr.rel (0) target = $region33
    $region32: #{tpu_custom_call.1} parent=1 // pred_region
      %61 = dma.done [#allocation6], 1024
    $region33: #{tpu_custom_call.1} parent=1 // pred_fallthru
      _
    %v63 = vld [vmem:[#allocation2] sm:$0xf]
    %v64 = vld [vmem:[#allocation2 + $0x4] sm:$0xf]
    %v65 = vld [vmem:[#allocation2 + $0x8] sm:$0xf]
    %v66 = vld [vmem:[#allocation2 + $0xc] sm:$0xf]
    %v67 = vld [vmem:[#allocation2 + $0x10] sm:$0xf]
    %v68 = vld [vmem:[#allocation2 + $0x14] sm:$0xf]
    %v69 = vld [vmem:[#allocation2 + $0x18] sm:$0xf]
    %v70 = vld [vmem:[#allocation2 + $0x1c] sm:$0xf]
    %v71 = vld [vmem:[#allocation2 + $0x20] sm:$0xf]
    %v72 = vld [vmem:[#allocation2 + $0x24] sm:$0xf]
    %v73 = vld [vmem:[#allocation2 + $0x28] sm:$0xf]
    %v74 = vld [vmem:[#allocation2 + $0x2c] sm:$0xf]
    %v75 = vld [vmem:[#allocation2 + $0x30] sm:$0xf]
    %v76 = vld [vmem:[#allocation2 + $0x34] sm:$0xf]
    %v77 = vld [vmem:[#allocation2 + $0x38] sm:$0xf]
    %v78 = vld [vmem:[#allocation2 + $0x3c] sm:$0xf]
    %v79 = vld [vmem:[#allocation5] sm:$0xf]
    %v80 = vld [vmem:[#allocation5 + $0x4] sm:$0xf]
    %v81 = vld [vmem:[#allocation5 + $0x8] sm:$0xf]
    %v82 = vld [vmem:[#allocation5 + $0xc] sm:$0xf]
    %v83 = vld [vmem:[#allocation5 + $0x10] sm:$0xf]
    %v84 = vld [vmem:[#allocation5 + $0x14] sm:$0xf]
    %v85 = vld [vmem:[#allocation5 + $0x18] sm:$0xf]
    %v86 = vld [vmem:[#allocation5 + $0x1c] sm:$0xf]
    %v87 = vld [vmem:[#allocation5 + $0x20] sm:$0xf]
    %v88 = vld [vmem:[#allocation5 + $0x24] sm:$0xf]
    %v89 = vld [vmem:[#allocation5 + $0x28] sm:$0xf]
    %v90 = vld [vmem:[#allocation5 + $0x2c] sm:$0xf]
    %v91 = vld [vmem:[#allocation5 + $0x30] sm:$0xf]
    %v92 = vld [vmem:[#allocation5 + $0x34] sm:$0xf]
    %v93 = vld [vmem:[#allocation5 + $0x38] sm:$0xf]
    %v94 = vld [vmem:[#allocation5 + $0x3c] sm:$0xf]
    %v95 = vld [vmem:[%s2] sm:$0x1]
    %v97 = vlaneseq
    %v98 = vshrl.u32 %v97, 7
    %v99 = vsub.s32 0, %v98
    %v100 = vrot.slane %v95, %v99
    %v118 = vunpack.c.l.b16 %v63
    %v119 = vunpack.c.l.b16 %v64
    %v120 = vunpack.c.l.b16 %v65
    %v121 = vunpack.c.l.b16 %v66
    %v122 = vunpack.c.l.b16 %v67
    %v123 = vunpack.c.l.b16 %v68
    %v124 = vunpack.c.l.b16 %v69
    %v125 = vunpack.c.l.b16 %v70
    %v126 = vunpack.c.l.b16 %v71
    %v127 = vunpack.c.l.b16 %v72
    %v128 = vunpack.c.l.b16 %v73
    %v129 = vunpack.c.l.b16 %v74
    %v130 = vunpack.c.l.b16 %v75
    %v131 = vunpack.c.l.b16 %v76
    %v132 = vunpack.c.l.b16 %v77
    %v133 = vunpack.c.l.b16 %v78
    %v134 = vpack.c.b16 %v119, %v118
    %v135 = vpack.c.b16 %v121, %v120
    %v136 = vpack.c.b16 %v123, %v122
    %v137 = vpack.c.b16 %v125, %v124
    %v138 = vpack.c.b16 %v127, %v126
    %v139 = vpack.c.b16 %v129, %v128
    %v140 = vpack.c.b16 %v131, %v130
    %v141 = vpack.c.b16 %v133, %v132
    %v166 = vunpack.c.l.b16 %v79
    %v167 = vunpack.c.l.b16 %v80
    %v168 = vunpack.c.l.b16 %v81
    %v169 = vunpack.c.l.b16 %v82
    %v170 = vunpack.c.l.b16 %v83
    %v171 = vunpack.c.l.b16 %v84
    %v172 = vunpack.c.l.b16 %v85
    %v173 = vunpack.c.l.b16 %v86
    %v174 = vunpack.c.l.b16 %v87
    %v175 = vunpack.c.l.b16 %v88
    %v176 = vunpack.c.l.b16 %v89
    %v177 = vunpack.c.l.b16 %v90
    %v178 = vunpack.c.l.b16 %v91
    %v179 = vunpack.c.l.b16 %v92
    %v180 = vunpack.c.l.b16 %v93
    %v181 = vunpack.c.l.b16 %v94
    %v182 = vpack.c.b16 %v167, %v166
    %v183 = vpack.c.b16 %v169, %v168
    %v184 = vpack.c.b16 %v171, %v170
    %v185 = vpack.c.b16 %v173, %v172
    %v186 = vpack.c.b16 %v175, %v174
    %v187 = vpack.c.b16 %v177, %v176
    %v188 = vpack.c.b16 %v179, %v178
    %v189 = vpack.c.b16 %v181, %v180
    %198 = vmatprep.subr.bf16.mxu0 0
    %199 = vmatpush1.bf16.msra.mxu0 %v189
    %200 = vmatprep.subr.bf16.mxu0 0
    %201 = vmatpush1.bf16.msra.mxu0 %v188
    %202 = vmatprep.subr.bf16.mxu0 0
    %203 = vmatpush1.bf16.msra.mxu0 %v187
    %204 = vmatprep.subr.bf16.mxu0 0
    %205 = vmatpush1.bf16.msra.mxu0 %v186
    %206 = vmatprep.subr.bf16.mxu0 0
    %207 = vmatpush1.bf16.msra.mxu0 %v185
    %208 = vmatprep.subr.bf16.mxu0 0
    %209 = vmatpush1.bf16.msra.mxu0 %v184
    %210 = vmatprep.subr.bf16.mxu0 0
    %211 = vmatpush1.bf16.msra.mxu0 %v183
    %212 = vmatprep.subr.bf16.mxu0 0
    %213 = vmatpush1.bf16.msra.mxu0 %v182
    %214 = vmatprep.subr.bf16.mxu0 0
    %215 = vmatpush2.bf16.msra.mxu0 0
    %216 = vmatprep.subr.bf16.mxu0 0
    %217 = vmatpush2.bf16.msra.mxu0 0
    %218 = vmatprep.subr.bf16.mxu0 0
    %219 = vmatpush2.bf16.msra.mxu0 0
    %220 = vmatprep.subr.bf16.mxu0 0
    %221 = vmatpush2.bf16.msra.mxu0 0
    %222 = vmatprep.subr.bf16.mxu0 0
    %223 = vmatpush2.bf16.msra.mxu0 0
    %224 = vmatprep.subr.bf16.mxu0 0
    %225 = vmatpush2.bf16.msra.mxu0 0
    %226 = vmatprep.subr.bf16.mxu0 0
    %227 = vmatpush2.bf16.msra.mxu0 0
    %228 = vmatprep.subr.bf16.mxu0 0
    %229 = vmatpush2.bf16.msra.mxu0 0
    %230 = vmatprep.mubr.bf16.mxu0 0
    %231 = vmatmul.mubr.bf16.gmra.mxu0 %v134
    %v232 = vpop.f32.mrf.mxu0
    %v233 = vadd.f32 %v100, %v232
    %v234 = vpop.f32.mrf.mxu0
    %v235 = vpop.f32.mrf.mxu0
    %v236 = vadd.f32 %v100, %v235
    %v237 = vpop.f32.mrf.mxu0
    %238 = vmatprep.mubr.bf16.mxu0 0
    %239 = vmatmul.mubr.bf16.gmra.mxu0 %v135
    %v240 = vpop.f32.mrf.mxu0
    %v241 = vadd.f32 %v100, %v240
    %v242 = vpop.f32.mrf.mxu0
    %v243 = vpop.f32.mrf.mxu0
    %v244 = vadd.f32 %v100, %v243
    %v245 = vpop.f32.mrf.mxu0
    %246 = vmatprep.mubr.bf16.mxu0 0
    %247 = vmatmul.mubr.bf16.gmra.mxu0 %v136
    %v248 = vpop.f32.mrf.mxu0
    %v249 = vadd.f32 %v100, %v248
    %v250 = vpop.f32.mrf.mxu0
    %v251 = vpop.f32.mrf.mxu0
    %v252 = vadd.f32 %v100, %v251
    %v253 = vpop.f32.mrf.mxu0
    %254 = vmatprep.mubr.bf16.mxu0 0
    %255 = vmatmul.mubr.bf16.gmra.mxu0 %v137
    %v256 = vpop.f32.mrf.mxu0
    %v257 = vadd.f32 %v100, %v256
    %v258 = vpop.f32.mrf.mxu0
    %v259 = vpop.f32.mrf.mxu0
    %v260 = vadd.f32 %v100, %v259
    %v261 = vpop.f32.mrf.mxu0
    %262 = vmatprep.mubr.bf16.mxu0 0
    %263 = vmatmul.mubr.bf16.gmra.mxu0 %v138
    %v264 = vpop.f32.mrf.mxu0
    %v265 = vadd.f32 %v100, %v264
    %v266 = vpop.f32.mrf.mxu0
    %v267 = vpop.f32.mrf.mxu0
    %v268 = vadd.f32 %v100, %v267
    %v269 = vpop.f32.mrf.mxu0
    %270 = vmatprep.mubr.bf16.mxu0 0
    %271 = vmatmul.mubr.bf16.gmra.mxu0 %v139
    %v272 = vpop.f32.mrf.mxu0
    %v273 = vadd.f32 %v100, %v272
    %v274 = vpop.f32.mrf.mxu0
    %v275 = vpop.f32.mrf.mxu0
    %v276 = vadd.f32 %v100, %v275
    %v277 = vpop.f32.mrf.mxu0
    %278 = vmatprep.mubr.bf16.mxu0 0
    %279 = vmatmul.mubr.bf16.gmra.mxu0 %v140
    %v280 = vpop.f32.mrf.mxu0
    %v281 = vadd.f32 %v100, %v280
    %v282 = vpop.f32.mrf.mxu0
    %v283 = vpop.f32.mrf.mxu0
    %v284 = vadd.f32 %v100, %v283
    %v285 = vpop.f32.mrf.mxu0
    %286 = vmatprep.mubr.bf16.mxu0 0
    %287 = vmatmul.mubr.bf16.gmra.mxu0 %v141
    %v288 = vpop.f32.mrf.mxu0
    %v289 = vadd.f32 %v100, %v288
    %v290 = vpop.f32.mrf.mxu0
    %v291 = vpop.f32.mrf.mxu0
    %v292 = vadd.f32 %v100, %v291
    %v293 = vpop.f32.mrf.mxu0
    %294 = vdwg.mxu0
    %v295 = vmax.f32 %v233, 0.0
    %v296 = vmax.f32 %v236, 0.0
    %v297 = vmax.f32 %v241, 0.0
    %v298 = vmax.f32 %v244, 0.0
    %v299 = vmax.f32 %v249, 0.0
    %v300 = vmax.f32 %v252, 0.0
    %v301 = vmax.f32 %v257, 0.0
    %v302 = vmax.f32 %v260, 0.0
    %v303 = vmax.f32 %v265, 0.0
    %v304 = vmax.f32 %v268, 0.0
    %v305 = vmax.f32 %v273, 0.0
    %v306 = vmax.f32 %v276, 0.0
    %v307 = vmax.f32 %v281, 0.0
    %v308 = vmax.f32 %v284, 0.0
    %v309 = vmax.f32 %v289, 0.0
    %v310 = vmax.f32 %v292, 0.0
    %v311 = vpack.c.bf16 %v296, %v295
    %v312 = vpack.c.bf16 %v298, %v297
    %v313 = vpack.c.bf16 %v300, %v299
    %v314 = vpack.c.bf16 %v302, %v301
    %v315 = vpack.c.bf16 %v304, %v303
    %v316 = vpack.c.bf16 %v306, %v305
    %v317 = vpack.c.bf16 %v308, %v307
    %v318 = vpack.c.bf16 %v310, %v309
    %v319 = vld [vmem:[#allocation7] sm:$0xf]
    %v320 = vld [vmem:[#allocation7 + $0x4] sm:$0xf]
    %v321 = vld [vmem:[#allocation7 + $0x8] sm:$0xf]
    %v322 = vld [vmem:[#allocation7 + $0xc] sm:$0xf]
    %v323 = vld [vmem:[#allocation7 + $0x10] sm:$0xf]
    %v324 = vld [vmem:[#allocation7 + $0x14] sm:$0xf]
    %v325 = vld [vmem:[#allocation7 + $0x18] sm:$0xf]
    %v326 = vld [vmem:[#allocation7 + $0x1c] sm:$0xf]
    %v327 = vld [vmem:[#allocation7 + $0x20] sm:$0xf]
    %v328 = vld [vmem:[#allocation7 + $0x24] sm:$0xf]
    %v329 = vld [vmem:[#allocation7 + $0x28] sm:$0xf]
    %v330 = vld [vmem:[#allocation7 + $0x2c] sm:$0xf]
    %v331 = vld [vmem:[#allocation7 + $0x30] sm:$0xf]
    %v332 = vld [vmem:[#allocation7 + $0x34] sm:$0xf]
    %v333 = vld [vmem:[#allocation7 + $0x38] sm:$0xf]
    %v334 = vld [vmem:[#allocation7 + $0x3c] sm:$0xf]
    %v335 = vld [vmem:[%s4] sm:$0x1]
    %v337 = vlaneseq
    %v338 = vshrl.u32 %v337, 7
    %v339 = vsub.s32 0, %v338
    %v340 = vrot.slane %v335, %v339
    %v358 = vunpack.c.l.b16 %v319
    %v359 = vunpack.c.l.b16 %v320
    %v360 = vunpack.c.l.b16 %v321
    %v361 = vunpack.c.l.b16 %v322
    %v362 = vunpack.c.l.b16 %v323
    %v363 = vunpack.c.l.b16 %v324
    %v364 = vunpack.c.l.b16 %v325
    %v365 = vunpack.c.l.b16 %v326
    %v366 = vunpack.c.l.b16 %v327
    %v367 = vunpack.c.l.b16 %v328
    %v368 = vunpack.c.l.b16 %v329
    %v369 = vunpack.c.l.b16 %v330
    %v370 = vunpack.c.l.b16 %v331
    %v371 = vunpack.c.l.b16 %v332
    %v372 = vunpack.c.l.b16 %v333
    %v373 = vunpack.c.l.b16 %v334
    %v374 = vpack.c.b16 %v359, %v358
    %v375 = vpack.c.b16 %v361, %v360
    %v376 = vpack.c.b16 %v363, %v362
    %v377 = vpack.c.b16 %v365, %v364
    %v378 = vpack.c.b16 %v367, %v366
    %v379 = vpack.c.b16 %v369, %v368
    %v380 = vpack.c.b16 %v371, %v370
    %v381 = vpack.c.b16 %v373, %v372
    %390 = vmatprep.subr.bf16.mxu0 0
    %391 = vmatpush1.bf16.msra.mxu0 %v381
    %392 = vmatprep.subr.bf16.mxu0 0
    %393 = vmatpush1.bf16.msra.mxu0 %v380
    %394 = vmatprep.subr.bf16.mxu0 0
    %395 = vmatpush1.bf16.msra.mxu0 %v379
    %396 = vmatprep.subr.bf16.mxu0 0
    %397 = vmatpush1.bf16.msra.mxu0 %v378
    %398 = vmatprep.subr.bf16.mxu0 0
    %399 = vmatpush1.bf16.msra.mxu0 %v377
    %400 = vmatprep.subr.bf16.mxu0 0
    %401 = vmatpush1.bf16.msra.mxu0 %v376
    %402 = vmatprep.subr.bf16.mxu0 0
    %403 = vmatpush1.bf16.msra.mxu0 %v375
    %404 = vmatprep.subr.bf16.mxu0 0
    %405 = vmatpush1.bf16.msra.mxu0 %v374
    %406 = vmatprep.subr.bf16.mxu0 0
    %407 = vmatpush2.bf16.msra.mxu0 0
    %408 = vmatprep.subr.bf16.mxu0 0
    %409 = vmatpush2.bf16.msra.mxu0 0
    %410 = vmatprep.subr.bf16.mxu0 0
    %411 = vmatpush2.bf16.msra.mxu0 0
    %412 = vmatprep.subr.bf16.mxu0 0
    %413 = vmatpush2.bf16.msra.mxu0 0
    %414 = vmatprep.subr.bf16.mxu0 0
    %415 = vmatpush2.bf16.msra.mxu0 0
    %416 = vmatprep.subr.bf16.mxu0 0
    %417 = vmatpush2.bf16.msra.mxu0 0
    %418 = vmatprep.subr.bf16.mxu0 0
    %419 = vmatpush2.bf16.msra.mxu0 0
    %420 = vmatprep.subr.bf16.mxu0 0
    %421 = vmatpush2.bf16.msra.mxu0 0
    %422 = vmatprep.mubr.bf16.mxu0 0
    %423 = vmatmul.mubr.bf16.gmra.mxu0 %v311
    %v424 = vpop.f32.mrf.mxu0
    %v425 = vadd.f32 %v340, %v424
    %v426 = vpop.f32.mrf.mxu0
    %v427 = vpop.f32.mrf.mxu0
    %v428 = vadd.f32 %v340, %v427
    %v429 = vpop.f32.mrf.mxu0
    %430 = vmatprep.mubr.bf16.mxu0 0
    %431 = vmatmul.mubr.bf16.gmra.mxu0 %v312
    %v432 = vpop.f32.mrf.mxu0
    %v433 = vadd.f32 %v340, %v432
    %v434 = vpop.f32.mrf.mxu0
    %v435 = vpop.f32.mrf.mxu0
    %v436 = vadd.f32 %v340, %v435
    %v437 = vpop.f32.mrf.mxu0
    %438 = vmatprep.mubr.bf16.mxu0 0
    %439 = vmatmul.mubr.bf16.gmra.mxu0 %v313
    %v440 = vpop.f32.mrf.mxu0
    %v441 = vadd.f32 %v340, %v440
    %v442 = vpop.f32.mrf.mxu0
    %v443 = vpop.f32.mrf.mxu0
    %v444 = vadd.f32 %v340, %v443
    %v445 = vpop.f32.mrf.mxu0
    %446 = vmatprep.mubr.bf16.mxu0 0
    %447 = vmatmul.mubr.bf16.gmra.mxu0 %v314
    %v448 = vpop.f32.mrf.mxu0
    %v449 = vadd.f32 %v340, %v448
    %v450 = vpop.f32.mrf.mxu0
    %v451 = vpop.f32.mrf.mxu0
    %v452 = vadd.f32 %v340, %v451
    %v453 = vpop.f32.mrf.mxu0
    %454 = vmatprep.mubr.bf16.mxu0 0
    %455 = vmatmul.mubr.bf16.gmra.mxu0 %v315
    %v456 = vpop.f32.mrf.mxu0
    %v457 = vadd.f32 %v340, %v456
    %v458 = vpop.f32.mrf.mxu0
    %v459 = vpop.f32.mrf.mxu0
    %v460 = vadd.f32 %v340, %v459
    %v461 = vpop.f32.mrf.mxu0
    %462 = vmatprep.mubr.bf16.mxu0 0
    %463 = vmatmul.mubr.bf16.gmra.mxu0 %v316
    %v464 = vpop.f32.mrf.mxu0
    %v465 = vadd.f32 %v340, %v464
    %v466 = vpop.f32.mrf.mxu0
    %v467 = vpop.f32.mrf.mxu0
    %v468 = vadd.f32 %v340, %v467
    %v469 = vpop.f32.mrf.mxu0
    %470 = vmatprep.mubr.bf16.mxu0 0
    %471 = vmatmul.mubr.bf16.gmra.mxu0 %v317
    %v472 = vpop.f32.mrf.mxu0
    %v473 = vadd.f32 %v340, %v472
    %v474 = vpop.f32.mrf.mxu0
    %v475 = vpop.f32.mrf.mxu0
    %v476 = vadd.f32 %v340, %v475
    %v477 = vpop.f32.mrf.mxu0
    %478 = vmatprep.mubr.bf16.mxu0 0
    %479 = vmatmul.mubr.bf16.gmra.mxu0 %v318
    %v480 = vpop.f32.mrf.mxu0
    %v481 = vadd.f32 %v340, %v480
    %v482 = vpop.f32.mrf.mxu0
    %v483 = vpop.f32.mrf.mxu0
    %v484 = vadd.f32 %v340, %v483
    %v485 = vpop.f32.mrf.mxu0
    %486 = vdwg.mxu0
    %487 = vst [vmem:[#allocation8] sm:$0xff] %v425
    %488 = vst [vmem:[#allocation8 + $0x8] sm:$0xff] %v428
    %489 = vst [vmem:[#allocation8 + $0x10] sm:$0xff] %v433
    %490 = vst [vmem:[#allocation8 + $0x18] sm:$0xff] %v436
    %491 = vst [vmem:[#allocation8 + $0x20] sm:$0xff] %v441
    %492 = vst [vmem:[#allocation8 + $0x28] sm:$0xff] %v444
    %493 = vst [vmem:[#allocation8 + $0x30] sm:$0xff] %v449
    %494 = vst [vmem:[#allocation8 + $0x38] sm:$0xff] %v452
    %495 = vst [vmem:[#allocation8 + $0x40] sm:$0xff] %v457
    %496 = vst [vmem:[#allocation8 + $0x48] sm:$0xff] %v460
    %497 = vst [vmem:[#allocation8 + $0x50] sm:$0xff] %v465
    %498 = vst [vmem:[#allocation8 + $0x58] sm:$0xff] %v468
    %499 = vst [vmem:[#allocation8 + $0x60] sm:$0xff] %v473
    %500 = vst [vmem:[#allocation8 + $0x68] sm:$0xff] %v476
    %501 = vst [vmem:[#allocation8 + $0x70] sm:$0xff] %v481
    %502 = vst [vmem:[#allocation8 + $0x78] sm:$0xff] %v484
    // Predicated region
    $region34: #{tpu_custom_call.1} parent=1 // pred_check
      _
    $region35: #{tpu_custom_call.1} parent=1 // pred_check_branch
      %504 = sbr.rel (0) target = $region37
    $region36: #{tpu_custom_call.1} parent=1 // pred_region
      %s506 = ssub.s32 2048, 2048
      %507 = vsyncadd [#allocation4], %s506
      %s508 = sshll.u32 [#allocation8], 4
      %s509 = int_to_ptr.vmem [resolvable:$true] %s508
      %514 = dma.vmem_to_hbm [thread:$0]  %s509, 2048, %s5, [#allocation4], 128, 128, 8
    $region37: #{tpu_custom_call.1} parent=1 // pred_fallthru
      _
    // Predicated region
    $region38: #{tpu_custom_call.1} parent=1 // pred_check
      _
    $region39: #{tpu_custom_call.1} parent=1 // pred_check_branch
      %516 = sbr.rel (0) target = $region41
    $region40: #{tpu_custom_call.1} parent=1 // pred_region
      %517 = dma.done [#allocation4], 2048
    $region41: #{tpu_custom_call.1} parent=1 // pred_fallthru
      _
    %518 = vsyncpa [#allocation3], 1
    %519 = vsyncpa [#allocation6], 1
    %520 = vsyncpa [#allocation4], 1

</llo_original>
